<compile_context>
chip_gen: v5e
topology: v5e:2x2
jax: 0.10.0
libtpu: 0.0.40
codegen_flags: <defaults>
</compile_context>

<pallas_src>
import functools
import math

import jax
import jax.numpy as jnp
from jax.experimental import pallas as pl
from jax.experimental.pallas import tpu as pltpu


_LANE = 128
_T_FOLD_MAX = 32                      # fold T into the block up to this many steps
_SMALL_INPUT_BYTES = 128 * 1024       # below this, plain jnp.mean wins (launch overhead)
_PIPELINE_INPUT_BYTES = 2 * 1024 * 1024  # above this, force >=4 grid steps for overlap


# ----------------------------- Pallas kernels ---------------------------------

def _mean_fold_t_kernel(x_ref, o_ref):
    """x_ref: (T, TR, LW), o_ref: (TR, LW). Mean over the leading T axis.

    Unrolled accumulate into a single (TR, LW) f32 accumulator; 1/T folded into
    the final scaled cast.  No (T, TR, LW) f32 temporary is materialized.
    """
    t = x_ref.shape[0]
    acc = x_ref[0].astype(jnp.float32)
    for i in range(1, t):                       # static unroll, t <= _T_FOLD_MAX
        acc = acc + x_ref[i].astype(jnp.float32)
    o_ref[...] = (acc * (1.0 / t)).astype(o_ref.dtype)


def _mean_split_t_kernel(x_ref, o_ref, acc_ref, *, inv_t):
    """x_ref: (TT, TR, LW), o_ref: (TR, LW), acc_ref: f32 VMEM (TR, LW).

    Large-T form: time is an 'arbitrary' grid axis so block bytes do not scale
    with T; accumulator initialized / finalized with pl.when.
    """
    s = pl.program_id(1)

    @pl.when(s == 0)
    def _():
        acc_ref[...] = jnp.zeros_like(acc_ref)

    tt = x_ref.shape[0]
    acc = acc_ref[...]
    for i in range(tt):                         # static unroll, tt <= 32
        acc = acc + x_ref[i].astype(jnp.float32)
    acc_ref[...] = acc

    @pl.when(s == pl.num_programs(1) - 1)
    def _():
        o_ref[...] = (acc_ref[...] * inv_t).astype(o_ref.dtype)


# ------------------------------- Helpers ---------------------------------------

def _cdiv(a, b):
    return -(-a // b)


def _round_up(x, m):
    return _cdiv(x, m) * m


def _vmem_budgets():
    """(total double-buffered footprint budget, vmem_limit_bytes) per generation."""
    vmem_cap = 128 * 1024 * 1024
    try:
        vmem_cap = int(pltpu.get_tpu_info().vmem_capacity_bytes)
    except Exception:
        pass
    kind = ""
    try:
        kind = jax.devices()[0].device_kind.lower()
    except Exception:
        pass
    if vmem_cap <= 64 * 1024 * 1024:
        # v7x-class: only 64 MiB VMEM per TensorCore -- keep buffers <= ~40 MiB.
        return 40 * 1024 * 1024, 48 * 1024 * 1024
    if "v5 lite" in kind or "v5e" in kind or "v5lite" in kind:
        # v5e: ~0.8 TB/s HBM saturates at small blocks; bigger tiles gain nothing.
        return 12 * 1024 * 1024, 32 * 1024 * 1024
    # v6e-class (128 MiB VMEM): large tiles, few grid steps.
    return 32 * 1024 * 1024, 64 * 1024 * 1024


def _pick_lane_width(total):
    """Largest lane-dense last dim (multiple of 128) that divides the feature count."""
    for lw in (2048, 1024, 512, 256, 128):
        if total % lw == 0:
            return lw
    return None


def _sublane_multiple(itemsize):
    """Packed sublane multiple: 8 for 4-byte, 16 for 2-byte, 32 for 1-byte dtypes."""
    return max(8, 32 // itemsize)


def _prefer_divisor(tr, n_rows, sub):
    """Shrink tr (in multiples of sub) to a divisor of n_rows if one is nearby,
    so the last row tile is full and the output store stays unmasked."""
    if tr >= n_rows or n_rows % tr == 0:
        return tr
    lo = max(sub, tr // 2)
    for cand in range(tr, lo - 1, -sub):
        if n_rows % cand == 0:
            return cand
    return tr


# ------------------------------- Wrapper ----------------------------------------

def _mean_over_time(x5):
    """x5: (T, *rest) 5-D -> mean over axis 0 via a tiled Pallas kernel."""
    t = x5.shape[0]
    out_shape = x5.shape[1:]
    total = math.prod(out_shape)
    dtype = x5.dtype
    itemsize = jnp.dtype(dtype).itemsize
    in_bytes = t * total * itemsize

    # Tiny inputs: fixed pallas_call overhead dominates and a 1-step grid cannot
    # pipeline; XLA's fused reduction wins.
    if in_bytes < _SMALL_INPUT_BYTES:
        return jnp.mean(x5, axis=0)

    lw = _pick_lane_width(total)
    if lw is None:
        # Feature count not a multiple of 128: a lane-dense view would need a full
        # extra HBM pad/copy pass, which costs more than it saves on a mem-bound op.
        # TODO(synk): an in-kernel masked partial lane tile would keep this in Pallas.
        return jnp.mean(x5, axis=0)

    n_rows = total // lw
    xr = x5.reshape(t, n_rows, lw)        # contiguous reshape: no extra HBM pass
    sub = _sublane_multiple(itemsize)
    budget, vmem_limit = _vmem_budgets()

    # ---------------- Variant A: fold T into each block (small/typical T) ---------
    use_fold_t = t <= _T_FOLD_MAX
    if use_fold_t:
        bytes_per_row = 2 * lw * itemsize * (t + 1)    # dbuf input + dbuf output
        tr = (budget // bytes_per_row) // sub * sub
        if tr < sub:
            use_fold_t = False                         # budget too tight: split T

    if use_fold_t:
        if n_rows <= sub:
            tr = n_rows                                # single full-dim block (legal)
        else:
            tr = min(tr, n_rows)
            if in_bytes >= _PIPELINE_INPUT_BYTES:
                # Keep >= ~4 grid steps so input/output DMAs overlap and the row
                # axis can shard across v7x's two TensorCores.
                tr = min(tr, max(sub, _round_up(_cdiv(n_rows, 4), sub)))
            tr = _prefer_divisor(tr, n_rows, sub)
        out = pl.pallas_call(
            _mean_fold_t_kernel,
            out_shape=jax.ShapeDtypeStruct((n_rows, lw), dtype),
            grid=(_cdiv(n_rows, tr),),
            in_specs=[pl.BlockSpec((t, tr, lw), lambda r: (0, r, 0))],
            out_specs=pl.BlockSpec((tr, lw), lambda r: (r, 0)),
            compiler_params=pltpu.CompilerParams(
                dimension_semantics=("parallel",),
                vmem_limit_bytes=vmem_limit,
            ),
        )(xr)
        return out.reshape(out_shape)

    # ---------------- Variant B: split T over an "arbitrary" grid axis ------------
    tt_cap = 32
    bytes_per_row = 2 * tt_cap * lw * itemsize + 2 * lw * itemsize + lw * 4
    tr = max(sub, (budget // bytes_per_row) // sub * sub)
    tr = min(tr, n_rows)
    if tr < n_rows:
        tr = _prefer_divisor(tr, n_rows, sub)
    # Largest tt that fits the budget with this tr and divides T exactly
    # (so there is no partial block on the reduction axis).
    fit = (budget - 2 * tr * lw * itemsize - tr * lw * 4) // max(1, 2 * tr * lw * itemsize)
    tt_cap = max(1, min(tt_cap, int(fit)))
    tt = 1
    for d in range(min(t, tt_cap), 0, -1):
        if t % d == 0:
            tt = d
            break

    kernel = functools.partial(_mean_split_t_kernel, inv_t=1.0 / t)
    out = pl.pallas_call(
        kernel,
        out_shape=jax.ShapeDtypeStruct((n_rows, lw), dtype),
        grid=(_cdiv(n_rows, tr), t // tt),
        in_specs=[pl.BlockSpec((tt, tr, lw), lambda r, s: (s, r, 0))],
        out_specs=pl.BlockSpec((tr, lw), lambda r, s: (r, 0)),
        scratch_shapes=[pltpu.VMEM((tr, lw), jnp.float32)],
        compiler_params=pltpu.CompilerParams(
            dimension_semantics=("parallel", "arbitrary"),
            vmem_limit_bytes=vmem_limit,
        ),
    )(xr)
    return out.reshape(out_shape)


class SpikeModule:
    """JAX/Pallas port of the PyTorch SpikeModule (no parameters)."""

    def __init__(self):
        self._spiking = True

    def set_spike_state(self, use_spike=True):
        self._spiking = use_spike

    def __call__(self, x):
        # Matches the PyTorch `if self._spiking is not True and len(x.shape) == 5`.
        if self._spiking is not True and x.ndim == 5:
            return _mean_over_time(x)
        # Identity path: return the input directly (no HBM copy, no kernel).
        return x


# --------------------------------- Main ------------------------------------------

if __name__ == "__main__":
    key = jax.random.PRNGKey(0)
    k1, k2, k3 = jax.random.split(key, 3)

    mod = SpikeModule()

    # Path 1: spiking=True (default) -> identity.
    T, N, C, H, W = 4, 2, 8, 32, 32
    x = jax.random.normal(k1, (T, N, C, H, W), dtype=jnp.float32)
    y_id = jax.block_until_ready(mod(x))
    assert y_id.shape == x.shape
    assert jnp.array_equal(y_id, x)

    # Path 2: spiking=False + 5-D input -> mean over time (Pallas fold-T kernel).
    mod.set_spike_state(False)
    y = jax.block_until_ready(mod(x))
    ref = jnp.mean(x, axis=0)
    assert y.shape == (N, C, H, W)
    assert jnp.allclose(y, ref, atol=1e-5, rtol=1e-5), float(jnp.max(jnp.abs(y - ref)))

    # Path 3: large T -> Pallas T-split accumulator kernel.
    xb = jax.random.normal(k2, (40, 2, 4, 16, 16), dtype=jnp.float32)
    yb = jax.block_until_ready(mod(xb))
    refb = jnp.mean(xb, axis=0)
    assert yb.shape == (2, 4, 16, 16)
    assert jnp.allclose(yb, refb, atol=1e-5, rtol=1e-5), float(jnp.max(jnp.abs(yb - refb)))

    # Path 4: tiny / non-128-divisible feature count -> jnp.mean fallback.
    xc = jax.random.normal(k3, (4, 2, 3, 5, 7), dtype=jnp.float32)
    yc = jax.block_until_ready(mod(xc))
    assert jnp.allclose(yc, jnp.mean(xc, axis=0), atol=1e-5, rtol=1e-5)

    # Path 5: spiking=False + non-5-D input -> identity.
    x4 = x[0]
    y4 = jax.block_until_ready(mod(x4))
    assert jnp.array_equal(y4, x4)

    print("KERNEL_OK")
</pallas_src>

<mosaic_0001>
module attributes {stable_mosaic.version = 11 : i64} {
  func.func @_mean_fold_t_kernel(%arg0: i32, %arg1: memref<4x8x2048xf32, #tpu.memory_space<vmem>>, %arg2: memref<8x2048xf32, #tpu.memory_space<vmem>>) attributes {dimension_semantics = [#tpu.dimension_semantics<parallel>], iteration_bounds = array<i64: 1>, scalar_prefetch = 0 : i64, scratch_operands = 0 : i64, tpu.core_type = #tpu.core_type<tc>, window_params = [{transform_indices = @transform_0, window_bounds = array<i64: 4, 8, 2048>}, {transform_indices = @transform_1, window_bounds = array<i64: 8, 2048>}]} {
    %c0 = arith.constant 0 : index
    %c0_0 = arith.constant 0 : index
    %c0_1 = arith.constant 0 : index
    %0 = vector.load %arg1[%c0, %c0_0, %c0_1] : memref<4x8x2048xf32, #tpu.memory_space<vmem>>, vector<1x8x2048xf32>
    %1 = vector.shape_cast %0 : vector<1x8x2048xf32> to vector<8x2048xf32>
    %c1 = arith.constant 1 : index
    %c0_2 = arith.constant 0 : index
    %c0_3 = arith.constant 0 : index
    %2 = vector.load %arg1[%c1, %c0_2, %c0_3] : memref<4x8x2048xf32, #tpu.memory_space<vmem>>, vector<1x8x2048xf32>
    %3 = vector.shape_cast %2 : vector<1x8x2048xf32> to vector<8x2048xf32>
    %4 = arith.addf %1, %3 : vector<8x2048xf32>
    %c2 = arith.constant 2 : index
    %c0_4 = arith.constant 0 : index
    %c0_5 = arith.constant 0 : index
    %5 = vector.load %arg1[%c2, %c0_4, %c0_5] : memref<4x8x2048xf32, #tpu.memory_space<vmem>>, vector<1x8x2048xf32>
    %6 = vector.shape_cast %5 : vector<1x8x2048xf32> to vector<8x2048xf32>
    %7 = arith.addf %4, %6 : vector<8x2048xf32>
    %c3 = arith.constant 3 : index
    %c0_6 = arith.constant 0 : index
    %c0_7 = arith.constant 0 : index
    %8 = vector.load %arg1[%c3, %c0_6, %c0_7] : memref<4x8x2048xf32, #tpu.memory_space<vmem>>, vector<1x8x2048xf32>
    %9 = vector.shape_cast %8 : vector<1x8x2048xf32> to vector<8x2048xf32>
    %10 = arith.addf %7, %9 : vector<8x2048xf32>
    %cst = arith.constant 2.500000e-01 : f32
    %11 = vector.broadcast %cst : f32 to vector<8x2048xf32>
    %12 = arith.mulf %10, %11 : vector<8x2048xf32>
    %c0_8 = arith.constant 0 : index
    %c0_9 = arith.constant 0 : index
    %13 = vector.load %arg2[%c0_8, %c0_9] : memref<8x2048xf32, #tpu.memory_space<vmem>>, vector<8x2048xf32>
    tpu.vector_store %arg2[%c0_8, %c0_9], %12 {strides = array<i32>} : memref<8x2048xf32, #tpu.memory_space<vmem>>, vector<8x2048xf32>,
    return
  }
  func.func @transform_0(%arg0: i32) -> (i32, i32, i32) {
    %c0_i32 = arith.constant 0 : i32
    %c0_i32_0 = arith.constant 0 : i32
    %c0_i32_1 = arith.constant 0 : i32
    return %c0_i32, %arg0, %c0_i32_0 : i32, i32, i32
  }
  func.func @transform_1(%arg0: i32) -> (i32, i32) {
    %c0_i32 = arith.constant 0 : i32
    %c0_i32_0 = arith.constant 0 : i32
    return %arg0, %c0_i32 : i32, i32
  }
}

</mosaic_0001>

<llo_original>
// kernel: tpu_custom_call.1
$region0: #{tpu_custom_call.1}
  #allocation0 [shape = 'u32[]', space=smem, size = 0x4, offset = 0x4, fixed_abs, tag = 'smem constant byte address 0x4 - core index']
  #allocation1 [shape = 'u32[72,128]{1,0:T(1,128)}', space=vmem, size = 0x9000, scoped, tag = 'internal scratch']
  %s0 = inlined_call_operand.hbm [shape: f32[4,8,2048], index: 0, kind: input, shape index: {}]
  %s1 = inlined_call_operand.hbm [shape: f32[8,2048], index: 1, kind: output, shape index: {}]
  %s2 = sld [smem:[#allocation0]]
  $region18: #{tpu_custom_call.1} parent=0
    _
  %s4 = ssub.s32 1, %s2
  %s5 = scalar_select 0, %s4, %s2
  $region1: #{tpu_custom_call.1} parent=0
    #allocation2 [shape = 'u8[262144]{0}', space=vmem, size = 0x40000, scoped, tag = 'input window, operand 0, single buffered']
    #allocation3 [shape = 's32[1]{0}', space=sflag, size = 0x4, scoped, tag = 'scoped memory for tpu_custom_call.1']
    #allocation4 [shape = 's32[1]{0}', space=sflag, size = 0x4, scoped, tag = 'scoped memory for tpu_custom_call.1']
    #allocation5 [shape = 'u8[65536]{0}', space=vmem, size = 0x10000, scoped, tag = 'output window, operand 0, single buffered']
    %6 = vsyncpa [#allocation3], 0
    %7 = vsyncpa [#allocation4], 0
    // Predicated region
    $region2: #{tpu_custom_call.1} parent=1 // pred_check
      _
    $region3: #{tpu_custom_call.1} parent=1 // pred_check_branch
      %9 = sbr.rel (0) target = $region5
    $region4: #{tpu_custom_call.1} parent=1 // pred_region
      %11 = vsyncadd [#allocation3], 0
      %s12 = sshll.u32 %s0, 4
      %s13 = int_to_ptr.hbm [resolvable:$true] %s12
      %s14 = sshll.u32 [#allocation2], 4
      %s15 = int_to_ptr.vmem [resolvable:$true] %s14
      %20 = dma.hbm_to_vmem [thread:$0]  %s13, 8192, %s15, [#allocation3], 2048, 2048, 128
    $region5: #{tpu_custom_call.1} parent=1 // pred_fallthru
      _
    // Predicated region
    $region6: #{tpu_custom_call.1} parent=1 // pred_check
      _
    $region7: #{tpu_custom_call.1} parent=1 // pred_check_branch
      %22 = sbr.rel (0) target = $region9
    $region8: #{tpu_custom_call.1} parent=1 // pred_region
      %24 = dma.done [#allocation3], 8192
    $region9: #{tpu_custom_call.1} parent=1 // pred_fallthru
      _
    %v25 = vld [vmem:[#allocation2] sm:$0xff]
    %v26 = vld [vmem:[#allocation2 + $0x8] sm:$0xff]
    %v27 = vld [vmem:[#allocation2 + $0x10] sm:$0xff]
    %v28 = vld [vmem:[#allocation2 + $0x18] sm:$0xff]
    %v29 = vld [vmem:[#allocation2 + $0x20] sm:$0xff]
    %v30 = vld [vmem:[#allocation2 + $0x28] sm:$0xff]
    %v31 = vld [vmem:[#allocation2 + $0x30] sm:$0xff]
    %v32 = vld [vmem:[#allocation2 + $0x38] sm:$0xff]
    %v33 = vld [vmem:[#allocation2 + $0x40] sm:$0xff]
    %v34 = vld [vmem:[#allocation2 + $0x48] sm:$0xff]
    %v35 = vld [vmem:[#allocation2 + $0x50] sm:$0xff]
    %v36 = vld [vmem:[#allocation2 + $0x58] sm:$0xff]
    %v37 = vld [vmem:[#allocation2 + $0x60] sm:$0xff]
    %v38 = vld [vmem:[#allocation2 + $0x68] sm:$0xff]
    %v39 = vld [vmem:[#allocation2 + $0x70] sm:$0xff]
    %v40 = vld [vmem:[#allocation2 + $0x78] sm:$0xff]
    %s41 = scalar_lea.vmem [#allocation2], 128
    %v42 = vld [vmem:[%s41] sm:$0xff]
    %v43 = vld [vmem:[%s41 + $0x8] sm:$0xff]
    %v44 = vld [vmem:[%s41 + $0x10] sm:$0xff]
    %v45 = vld [vmem:[%s41 + $0x18] sm:$0xff]
    %v46 = vld [vmem:[%s41 + $0x20] sm:$0xff]
    %v47 = vld [vmem:[%s41 + $0x28] sm:$0xff]
    %v48 = vld [vmem:[%s41 + $0x30] sm:$0xff]
    %v49 = vld [vmem:[%s41 + $0x38] sm:$0xff]
    %v50 = vld [vmem:[%s41 + $0x40] sm:$0xff]
    %v51 = vld [vmem:[%s41 + $0x48] sm:$0xff]
    %v52 = vld [vmem:[%s41 + $0x50] sm:$0xff]
    %v53 = vld [vmem:[%s41 + $0x58] sm:$0xff]
    %v54 = vld [vmem:[%s41 + $0x60] sm:$0xff]
    %v55 = vld [vmem:[%s41 + $0x68] sm:$0xff]
    %v56 = vld [vmem:[%s41 + $0x70] sm:$0xff]
    %v57 = vld [vmem:[%s41 + $0x78] sm:$0xff]
    %v58 = vadd.f32 %v25, %v42
    %v59 = vadd.f32 %v26, %v43
    %v60 = vadd.f32 %v27, %v44
    %v61 = vadd.f32 %v28, %v45
    %v62 = vadd.f32 %v29, %v46
    %v63 = vadd.f32 %v30, %v47
    %v64 = vadd.f32 %v31, %v48
    %v65 = vadd.f32 %v32, %v49
    %v66 = vadd.f32 %v33, %v50
    %v67 = vadd.f32 %v34, %v51
    %v68 = vadd.f32 %v35, %v52
    %v69 = vadd.f32 %v36, %v53
    %v70 = vadd.f32 %v37, %v54
    %v71 = vadd.f32 %v38, %v55
    %v72 = vadd.f32 %v39, %v56
    %v73 = vadd.f32 %v40, %v57
    %s74 = scalar_lea.vmem [#allocation2], 256
    %v75 = vld [vmem:[%s74] sm:$0xff]
    %v76 = vld [vmem:[%s74 + $0x8] sm:$0xff]
    %v77 = vld [vmem:[%s74 + $0x10] sm:$0xff]
    %v78 = vld [vmem:[%s74 + $0x18] sm:$0xff]
    %v79 = vld [vmem:[%s74 + $0x20] sm:$0xff]
    %v80 = vld [vmem:[%s74 + $0x28] sm:$0xff]
    %v81 = vld [vmem:[%s74 + $0x30] sm:$0xff]
    %v82 = vld [vmem:[%s74 + $0x38] sm:$0xff]
    %v83 = vld [vmem:[%s74 + $0x40] sm:$0xff]
    %v84 = vld [vmem:[%s74 + $0x48] sm:$0xff]
    %v85 = vld [vmem:[%s74 + $0x50] sm:$0xff]
    %v86 = vld [vmem:[%s74 + $0x58] sm:$0xff]
    %v87 = vld [vmem:[%s74 + $0x60] sm:$0xff]
    %v88 = vld [vmem:[%s74 + $0x68] sm:$0xff]
    %v89 = vld [vmem:[%s74 + $0x70] sm:$0xff]
    %v90 = vld [vmem:[%s74 + $0x78] sm:$0xff]
    %v91 = vadd.f32 %v58, %v75
    %v92 = vadd.f32 %v59, %v76
    %v93 = vadd.f32 %v60, %v77
    %v94 = vadd.f32 %v61, %v78
    %v95 = vadd.f32 %v62, %v79
    %v96 = vadd.f32 %v63, %v80
    %v97 = vadd.f32 %v64, %v81
    %v98 = vadd.f32 %v65, %v82
    %v99 = vadd.f32 %v66, %v83
    %v100 = vadd.f32 %v67, %v84
    %v101 = vadd.f32 %v68, %v85
    %v102 = vadd.f32 %v69, %v86
    %v103 = vadd.f32 %v70, %v87
    %v104 = vadd.f32 %v71, %v88
    %v105 = vadd.f32 %v72, %v89
    %v106 = vadd.f32 %v73, %v90
    %s107 = scalar_lea.vmem [#allocation2], 384
    %v108 = vld [vmem:[%s107] sm:$0xff]
    %v109 = vld [vmem:[%s107 + $0x8] sm:$0xff]
    %v110 = vld [vmem:[%s107 + $0x10] sm:$0xff]
    %v111 = vld [vmem:[%s107 + $0x18] sm:$0xff]
    %v112 = vld [vmem:[%s107 + $0x20] sm:$0xff]
    %v113 = vld [vmem:[%s107 + $0x28] sm:$0xff]
    %v114 = vld [vmem:[%s107 + $0x30] sm:$0xff]
    %v115 = vld [vmem:[%s107 + $0x38] sm:$0xff]
    %v116 = vld [vmem:[%s107 + $0x40] sm:$0xff]
    %v117 = vld [vmem:[%s107 + $0x48] sm:$0xff]
    %v118 = vld [vmem:[%s107 + $0x50] sm:$0xff]
    %v119 = vld [vmem:[%s107 + $0x58] sm:$0xff]
    %v120 = vld [vmem:[%s107 + $0x60] sm:$0xff]
    %v121 = vld [vmem:[%s107 + $0x68] sm:$0xff]
    %v122 = vld [vmem:[%s107 + $0x70] sm:$0xff]
    %v123 = vld [vmem:[%s107 + $0x78] sm:$0xff]
    %v124 = vadd.f32 %v91, %v108
    %v125 = vadd.f32 %v92, %v109
    %v126 = vadd.f32 %v93, %v110
    %v127 = vadd.f32 %v94, %v111
    %v128 = vadd.f32 %v95, %v112
    %v129 = vadd.f32 %v96, %v113
    %v130 = vadd.f32 %v97, %v114
    %v131 = vadd.f32 %v98, %v115
    %v132 = vadd.f32 %v99, %v116
    %v133 = vadd.f32 %v100, %v117
    %v134 = vadd.f32 %v101, %v118
    %v135 = vadd.f32 %v102, %v119
    %v136 = vadd.f32 %v103, %v120
    %v137 = vadd.f32 %v104, %v121
    %v138 = vadd.f32 %v105, %v122
    %v139 = vadd.f32 %v106, %v123
    %v140 = vmul.f32 %v124, 0.25
    %v141 = vmul.f32 %v125, 0.25
    %v142 = vmul.f32 %v126, 0.25
    %v143 = vmul.f32 %v127, 0.25
    %v144 = vmul.f32 %v128, 0.25
    %v145 = vmul.f32 %v129, 0.25
    %v146 = vmul.f32 %v130, 0.25
    %v147 = vmul.f32 %v131, 0.25
    %v148 = vmul.f32 %v132, 0.25
    %v149 = vmul.f32 %v133, 0.25
    %v150 = vmul.f32 %v134, 0.25
    %v151 = vmul.f32 %v135, 0.25
    %v152 = vmul.f32 %v136, 0.25
    %v153 = vmul.f32 %v137, 0.25
    %v154 = vmul.f32 %v138, 0.25
    %v155 = vmul.f32 %v139, 0.25
    %156 = vst [vmem:[#allocation5] sm:$0xff] %v140
    %157 = vst [vmem:[#allocation5 + $0x8] sm:$0xff] %v141
    %158 = vst [vmem:[#allocation5 + $0x10] sm:$0xff] %v142
    %159 = vst [vmem:[#allocation5 + $0x18] sm:$0xff] %v143
    %160 = vst [vmem:[#allocation5 + $0x20] sm:$0xff] %v144
    %161 = vst [vmem:[#allocation5 + $0x28] sm:$0xff] %v145
    %162 = vst [vmem:[#allocation5 + $0x30] sm:$0xff] %v146
    %163 = vst [vmem:[#allocation5 + $0x38] sm:$0xff] %v147
    %164 = vst [vmem:[#allocation5 + $0x40] sm:$0xff] %v148
    %165 = vst [vmem:[#allocation5 + $0x48] sm:$0xff] %v149
    %166 = vst [vmem:[#allocation5 + $0x50] sm:$0xff] %v150
    %167 = vst [vmem:[#allocation5 + $0x58] sm:$0xff] %v151
    %168 = vst [vmem:[#allocation5 + $0x60] sm:$0xff] %v152
    %169 = vst [vmem:[#allocation5 + $0x68] sm:$0xff] %v153
    %170 = vst [vmem:[#allocation5 + $0x70] sm:$0xff] %v154
    %171 = vst [vmem:[#allocation5 + $0x78] sm:$0xff] %v155
    // Predicated region
    $region10: #{tpu_custom_call.1} parent=1 // pred_check
      _
    $region11: #{tpu_custom_call.1} parent=1 // pred_check_branch
      %173 = sbr.rel (0) target = $region13
    $region12: #{tpu_custom_call.1} parent=1 // pred_region
      %175 = vsyncadd [#allocation4], 0
      %s177 = sshll.u32 [#allocation5], 4
      %s178 = int_to_ptr.vmem [resolvable:$true] %s177
      %s179 = sshll.u32 %s1, 4
      %s180 = int_to_ptr.hbm [resolvable:$true] %s179
      %182 = dma.vmem_to_hbm [thread:$0]  %s178, 2048, %s180, [#allocation4]
    $region13: #{tpu_custom_call.1} parent=1 // pred_fallthru
      _
    // Predicated region
    $region14: #{tpu_custom_call.1} parent=1 // pred_check
      _
    $region15: #{tpu_custom_call.1} parent=1 // pred_check_branch
      %184 = sbr.rel (0) target = $region17
    $region16: #{tpu_custom_call.1} parent=1 // pred_region
      %186 = dma.done [#allocation4], 2048
    $region17: #{tpu_custom_call.1} parent=1 // pred_fallthru
      _
    %187 = vsyncpa [#allocation3], 1
    %188 = vsyncpa [#allocation4], 1

</llo_original>
